<compile_context>
chip_gen: v5e
topology: v5e:2x2
jax: 0.10.0
libtpu: 0.0.40
codegen_flags: <defaults>
</compile_context>

<pallas_src>
from functools import partial

import jax
import jax.numpy as jnp
from jax.experimental import pallas as pl
from jax.experimental.pallas import tpu as pltpu  # noqa: F401  (TPU backend)

BN_EPS = 1e-5
LANE = 128


def mlp_kernel(x_ref, w1_ref, vecs_ref, w2_ref, o_ref):
    hidden_dim = w1_ref.shape[1]

    # fc1 on the MXU: cast x to bf16 in-kernel (weights already bf16 at rest),
    # accumulate in f32. fc1 bias intentionally omitted (cancelled by BN mean).
    x_bf = x_ref[...].astype(jnp.bfloat16)
    h = jnp.dot(x_bf, w1_ref[...],
                preferred_element_type=jnp.float32)               # (N, H) f32

    # BatchNorm1d (training-mode) stats, single pass, f32:
    #   mean = E[h], var = max(E[h^2] - mean^2, 0)  (biased variance, clamped)
    n_inv = jnp.float32(1.0 / h.shape[0])
    mean = jnp.sum(h, axis=0, keepdims=True) * n_inv               # (1, H)
    mean_sq = jnp.sum(h * h, axis=0, keepdims=True) * n_inv        # (1, H)
    var = jnp.maximum(mean_sq - mean * mean, 0.0)                  # (1, H)

    # Per-feature vectors arrive packed in one (3, out_pad) f32 tile:
    #   row 0: gamma (lanes [:H]), row 1: beta (lanes [:H]), row 2: fc2 bias.
    gamma = vecs_ref[0:1, :hidden_dim]                             # (1, H)
    beta = vecs_ref[1:2, :hidden_dim]                              # (1, H)
    b2 = vecs_ref[2:3, :]                                          # (1, out_pad)

    # Fold normalization + affine into one scale/shift over the (N, H) tile.
    inv_std = jax.lax.rsqrt(var + BN_EPS)
    scale = gamma * inv_std
    shift = beta - mean * scale

    # ReLU, f32.
    h_act = jnp.maximum(h * scale + shift, 0.0)                    # (N, H)

    # fc2 on the MXU: f32 LHS (no post-BN precision loss), bf16 weights at rest
    # up-cast in-kernel, f32 accumulate, then bias. Lane-dense (N, 128) store.
    out = jnp.dot(h_act, w2_ref[...].astype(jnp.float32),
                  preferred_element_type=jnp.float32) + b2
    o_ref[...] = out.astype(o_ref.dtype)


def prepare_params(w1, b1, gamma, beta, w2, b2):
    """One-time parameter prep (cache the result; do NOT call per forward).

    b1 is accepted for API parity with nn.Linear but never shipped to the
    kernel: training-mode BN cancels it exactly.
    """
    del b1
    hidden_dim, out_dim = w2.shape
    out_pad = pl.cdiv(out_dim, LANE) * LANE

    w1_bf = w1.astype(jnp.bfloat16)                                # (in, H) bf16

    # fc2 columns zero-padded to a lane-dense 128-wide slab, bf16 at rest.
    w2_bf = (jnp.zeros((hidden_dim, out_pad), jnp.bfloat16)
             .at[:, :out_dim].set(w2.astype(jnp.bfloat16)))

    # Pack gamma / beta / fc2-bias into one f32 (3, out_pad) array -> one DMA.
    vecs = jnp.zeros((3, out_pad), jnp.float32)
    vecs = vecs.at[0, :hidden_dim].set(gamma.reshape(-1).astype(jnp.float32))
    vecs = vecs.at[1, :hidden_dim].set(beta.reshape(-1).astype(jnp.float32))
    vecs = vecs.at[2, :out_dim].set(b2.reshape(-1).astype(jnp.float32))

    return w1_bf, vecs, w2_bf, out_dim


@partial(jax.jit, static_argnames=("out_dim",))
def mlp_forward(x, w1_bf, vecs, w2_bf, *, out_dim):
    """Jitted forward: one pallas_call + the padding slice (fused by XLA)."""
    n = x.shape[0]
    out_pad = w2_bf.shape[1]

    def full_spec(shape):
        # Single grid point -> block == full array (shapes satisfy the
        # "equal the full array dims" escape of the (8,128) rule).
        return pl.BlockSpec(shape, lambda: tuple(0 for _ in shape))

    out_padded = pl.pallas_call(
        mlp_kernel,
        out_shape=jax.ShapeDtypeStruct((n, out_pad), jnp.float32),
        grid=(),
        in_specs=[
            full_spec(x.shape),
            full_spec(w1_bf.shape),
            full_spec(vecs.shape),
            full_spec(w2_bf.shape),
        ],
        out_specs=full_spec((n, out_pad)),
    )(x, w1_bf, vecs, w2_bf)

    return out_padded[:, :out_dim].astype(x.dtype)


def mlp_reference(x, w1, b1, gamma, beta, w2, b2):
    # Pure-f32 reference matching the PyTorch module (fc1 bias INCLUDED,
    # training-mode BN with biased batch variance).
    h = x.astype(jnp.float32) @ w1 + b1
    mean = jnp.mean(h, axis=0, keepdims=True)
    var = jnp.mean((h - mean) ** 2, axis=0, keepdims=True)
    h = (h - mean) / jnp.sqrt(var + BN_EPS)
    h = h * gamma + beta
    h = jnp.maximum(h, 0.0)
    return h @ w2 + b2


if __name__ == "__main__":
    # Small shapes consistent with the module's forward.
    batch, input_dim, hidden_dim, output_dim = 8, 16, 32, 8

    key = jax.random.PRNGKey(0)
    kx, kw1, kb1, kg, kbe, kw2, kb2 = jax.random.split(key, 7)

    x = jax.random.normal(kx, (batch, input_dim), dtype=jnp.float32)

    # Deterministic parameter init (uniform, roughly matching nn.Linear scale).
    lim1 = 1.0 / (input_dim ** 0.5)
    w1 = jax.random.uniform(kw1, (input_dim, hidden_dim), jnp.float32, -lim1, lim1)
    b1 = jax.random.uniform(kb1, (1, hidden_dim), jnp.float32, -lim1, lim1)

    gamma = jnp.ones((1, hidden_dim), jnp.float32) + 0.1 * jax.random.normal(kg, (1, hidden_dim))
    beta = 0.1 * jax.random.normal(kbe, (1, hidden_dim), dtype=jnp.float32)

    lim2 = 1.0 / (hidden_dim ** 0.5)
    w2 = jax.random.uniform(kw2, (hidden_dim, output_dim), jnp.float32, -lim2, lim2)
    b2 = jax.random.uniform(kb2, (1, output_dim), jnp.float32, -lim2, lim2)

    # One-time prep (cached across calls), then a single jitted forward.
    w1_bf, vecs, w2_bf, out_dim = prepare_params(w1, b1, gamma, beta, w2, b2)

    out = mlp_forward(x, w1_bf, vecs, w2_bf, out_dim=out_dim)
    out = jax.block_until_ready(out)

    ref = mlp_reference(x, w1, b1, gamma, beta, w2, b2)
    assert out.shape == (batch, output_dim)
    # fc1 runs with bf16 MXU operands -> slightly loose tolerance vs. pure f32.
    assert jnp.allclose(out, ref, atol=2e-2, rtol=2e-2), "mismatch vs reference"

    print("KERNEL_OK")
</pallas_src>

<mosaic_0001>
module attributes {stable_mosaic.version = 11 : i64} {
  func.func @mlp_kernel(%arg0: memref<8x16xf32, #tpu.memory_space<vmem>>, %arg1: memref<16x32xbf16, #tpu.memory_space<vmem>>, %arg2: memref<3x128xf32, #tpu.memory_space<vmem>>, %arg3: memref<32x128xbf16, #tpu.memory_space<vmem>>, %arg4: memref<8x128xf32, #tpu.memory_space<vmem>>) attributes {dimension_semantics = [], scalar_prefetch = 0 : i64, scratch_operands = 0 : i64, tpu.core_type = #tpu.core_type<tc>} {
    %c0 = arith.constant 0 : index
    %c0_0 = arith.constant 0 : index
    %0 = vector.load %arg0[%c0, %c0_0] : memref<8x16xf32, #tpu.memory_space<vmem>>, vector<8x16xf32>
    %1 = arith.truncf %0 : vector<8x16xf32> to vector<8x16xbf16>
    %c0_1 = arith.constant 0 : index
    %c0_2 = arith.constant 0 : index
    %2 = vector.load %arg1[%c0_1, %c0_2] : memref<16x32xbf16, #tpu.memory_space<vmem>>, vector<16x32xbf16>
    %cst = arith.constant dense<0.000000e+00> : vector<8x32xf32>
    %3 = tpu.matmul %1, %2, %cst {dimension_numbers = #tpu.dot_dimension_numbers<[1], [0], [0], [1], [0, 0, 1, 1], [], []>} : vector<8x16xbf16>, vector<16x32xbf16>, vector<8x32xf32> -> vector<8x32xf32>
    %cst_3 = arith.constant dense<0.000000e+00> : vector<32xf32>
    %4 = vector.multi_reduction <add>, %3, %cst_3 [0] : vector<8x32xf32> to vector<32xf32>
    %5 = vector.shape_cast %4 : vector<32xf32> to vector<1x32xf32>
    %cst_4 = arith.constant 1.250000e-01 : f32
    %6 = vector.broadcast %cst_4 : f32 to vector<1x32xf32>
    %7 = arith.mulf %5, %6 : vector<1x32xf32>
    %8 = arith.mulf %3, %3 : vector<8x32xf32>
    %cst_5 = arith.constant dense<0.000000e+00> : vector<32xf32>
    %9 = vector.multi_reduction <add>, %8, %cst_5 [0] : vector<8x32xf32> to vector<32xf32>
    %10 = vector.shape_cast %9 : vector<32xf32> to vector<1x32xf32>
    %cst_6 = arith.constant 1.250000e-01 : f32
    %11 = vector.broadcast %cst_6 : f32 to vector<1x32xf32>
    %12 = arith.mulf %10, %11 : vector<1x32xf32>
    %13 = arith.mulf %7, %7 : vector<1x32xf32>
    %14 = arith.subf %12, %13 : vector<1x32xf32>
    %cst_7 = arith.constant 0.000000e+00 : f32
    %15 = vector.broadcast %cst_7 : f32 to vector<1x32xf32>
    %16 = arith.maximumf %14, %15 : vector<1x32xf32>
    %c0_8 = arith.constant 0 : index
    %c0_9 = arith.constant 0 : index
    %17 = vector.load %arg2[%c0_8, %c0_9] : memref<3x128xf32, #tpu.memory_space<vmem>>, vector<1x32xf32>
    %c1 = arith.constant 1 : index
    %c0_10 = arith.constant 0 : index
    %18 = vector.load %arg2[%c1, %c0_10] : memref<3x128xf32, #tpu.memory_space<vmem>>, vector<1x32xf32>
    %c2 = arith.constant 2 : index
    %c0_11 = arith.constant 0 : index
    %19 = vector.load %arg2[%c2, %c0_11] : memref<3x128xf32, #tpu.memory_space<vmem>>, vector<1x128xf32>
    %cst_12 = arith.constant 9.99999974E-6 : f32
    %20 = vector.broadcast %cst_12 : f32 to vector<1x32xf32>
    %21 = arith.addf %16, %20 : vector<1x32xf32>
    %22 = math.rsqrt %21 : vector<1x32xf32>
    %23 = arith.mulf %17, %22 : vector<1x32xf32>
    %24 = arith.mulf %7, %23 : vector<1x32xf32>
    %25 = arith.subf %18, %24 : vector<1x32xf32>
    %26 = vector.broadcast %23 : vector<1x32xf32> to vector<8x32xf32>
    %27 = arith.mulf %3, %26 : vector<8x32xf32>
    %28 = vector.broadcast %25 : vector<1x32xf32> to vector<8x32xf32>
    %29 = arith.addf %27, %28 : vector<8x32xf32>
    %cst_13 = arith.constant 0.000000e+00 : f32
    %30 = vector.broadcast %cst_13 : f32 to vector<8x32xf32>
    %31 = arith.maximumf %29, %30 : vector<8x32xf32>
    %c0_14 = arith.constant 0 : index
    %c0_15 = arith.constant 0 : index
    %32 = vector.load %arg3[%c0_14, %c0_15] : memref<32x128xbf16, #tpu.memory_space<vmem>>, vector<32x128xbf16>
    %33 = arith.extf %32 : vector<32x128xbf16> to vector<32x128xf32>
    %cst_16 = arith.constant dense<0.000000e+00> : vector<8x128xf32>
    %34 = tpu.matmul %31, %33, %cst_16 {dimension_numbers = #tpu.dot_dimension_numbers<[1], [0], [0], [1], [0, 0, 1, 1], [], []>} : vector<8x32xf32>, vector<32x128xf32>, vector<8x128xf32> -> vector<8x128xf32>
    %35 = vector.broadcast %19 : vector<1x128xf32> to vector<8x128xf32>
    %36 = arith.addf %34, %35 : vector<8x128xf32>
    %c0_17 = arith.constant 0 : index
    %c0_18 = arith.constant 0 : index
    %37 = vector.load %arg4[%c0_17, %c0_18] : memref<8x128xf32, #tpu.memory_space<vmem>>, vector<8x128xf32>
    tpu.vector_store %arg4[%c0_17, %c0_18], %36 {strides = array<i32>} : memref<8x128xf32, #tpu.memory_space<vmem>>, vector<8x128xf32>,
    return
  }
}

</mosaic_0001>

<llo_original>
// kernel: mlp_forward.1
$region0: #{mlp_forward.1}
  #allocation0 [shape = 'u32[]', space=smem, size = 0x4, offset = 0x4, fixed_abs, tag = 'smem constant byte address 0x4 - core index']
  #allocation1 [shape = 'u32[72,128]{1,0:T(1,128)}', space=vmem, size = 0x9000, scoped, tag = 'internal scratch']
  %s0 = inlined_call_operand.hbm [shape: f32[8,16], index: 0, kind: input, shape index: {}]
  %s1 = inlined_call_operand.hbm [shape: bf16[16,32], index: 1, kind: input, shape index: {}]
  %s2 = inlined_call_operand.hbm [shape: f32[3,128], index: 2, kind: input, shape index: {}]
  %s3 = inlined_call_operand.hbm [shape: bf16[32,128], index: 3, kind: input, shape index: {}]
  %s4 = inlined_call_operand.hbm [shape: f32[8,128], index: 4, kind: output, shape index: {}]
  %s5 = sld [smem:[#allocation0]]
  $region42: #{mlp_forward.1} parent=0
    _
  %s7 = ssub.s32 1, %s5
  %s8 = scalar_select 0, %s7, %s5
  $region1: #{mlp_forward.1} parent=0
    #allocation2 [shape = 'u8[4096]{0}', space=vmem, size = 0x1000, scoped, tag = 'input window, operand 0, single buffered']
    #allocation3 [shape = 's32[1]{0}', space=sflag, size = 0x4, scoped, tag = 'scoped memory for mlp_forward.1']
    #allocation4 [shape = 's32[1]{0}', space=sflag, size = 0x4, scoped, tag = 'scoped memory for mlp_forward.1']
    #allocation5 [shape = 'u8[4096]{0}', space=vmem, size = 0x1000, scoped, tag = 'input window, operand 1, single buffered']
    #allocation6 [shape = 's32[1]{0}', space=sflag, size = 0x4, scoped, tag = 'scoped memory for mlp_forward.1']
    #allocation7 [shape = 'u8[2048]{0}', space=vmem, size = 0x800, scoped, tag = 'input window, operand 2, single buffered']
    #allocation8 [shape = 'u8[8192]{0}', space=vmem, size = 0x2000, scoped, tag = 'input window, operand 3, single buffered']
    #allocation9 [shape = 's32[1]{0}', space=sflag, size = 0x4, scoped, tag = 'scoped memory for mlp_forward.1']
    #allocation10 [shape = 'u8[4096]{0}', space=vmem, size = 0x1000, scoped, tag = 'output window, operand 0, single buffered']
    %9 = vsyncpa [#allocation3], 0
    %10 = vsyncpa [#allocation6], 0
    %11 = vsyncpa [#allocation9], 0
    %12 = vsyncpa [#allocation4], 0
    // Predicated region
    $region2: #{mlp_forward.1} parent=1 // pred_check
      _
    $region3: #{mlp_forward.1} parent=1 // pred_check_branch
      %14 = sbr.rel (0) target = $region5
    $region4: #{mlp_forward.1} parent=1 // pred_region
      %16 = vsyncadd [#allocation3], 0
      %s18 = sshll.u32 %s0, 4
      %s19 = int_to_ptr.hbm [resolvable:$true] %s18
      %s20 = sshll.u32 [#allocation2], 4
      %s21 = int_to_ptr.vmem [resolvable:$true] %s20
      %23 = dma.hbm_to_vmem [thread:$0]  %s19, 128, %s21, [#allocation3]
    $region5: #{mlp_forward.1} parent=1 // pred_fallthru
      _
    // Predicated region
    $region6: #{mlp_forward.1} parent=1 // pred_check
      _
    $region7: #{mlp_forward.1} parent=1 // pred_check_branch
      %25 = sbr.rel (0) target = $region9
    $region8: #{mlp_forward.1} parent=1 // pred_region
      %27 = vsyncadd [#allocation6], 0
      %s28 = sshll.u32 %s1, 4
      %s29 = int_to_ptr.hbm [resolvable:$true] %s28
      %s30 = sshll.u32 [#allocation5], 4
      %s31 = int_to_ptr.vmem [resolvable:$true] %s30
      %36 = dma.hbm_to_vmem [thread:$0]  %s29, 128, %s31, [#allocation6], 64, 64, 4
    $region9: #{mlp_forward.1} parent=1 // pred_fallthru
      _
    // Predicated region
    $region10: #{mlp_forward.1} parent=1 // pred_check
      _
    $region11: #{mlp_forward.1} parent=1 // pred_check_branch
      %38 = sbr.rel (0) target = $region13
    $region12: #{mlp_forward.1} parent=1 // pred_region
      %40 = vsyncadd [#allocation6], 0
      %s42 = sshll.u32 %s2, 4
      %s43 = int_to_ptr.hbm [resolvable:$true] %s42
      %s44 = sshll.u32 [#allocation7], 4
      %s45 = int_to_ptr.vmem [resolvable:$true] %s44
      %47 = dma.hbm_to_vmem [thread:$0]  %s43, 64, %s45, [#allocation6]
    $region13: #{mlp_forward.1} parent=1 // pred_fallthru
      _
    // Predicated region
    $region14: #{mlp_forward.1} parent=1 // pred_check
      _
    $region15: #{mlp_forward.1} parent=1 // pred_check_branch
      %49 = sbr.rel (0) target = $region17
    $region16: #{mlp_forward.1} parent=1 // pred_region
      %51 = vsyncadd [#allocation9], 0
      %s52 = sshll.u32 %s3, 4
      %s53 = int_to_ptr.hbm [resolvable:$true] %s52
      %s54 = sshll.u32 [#allocation8], 4
      %s55 = int_to_ptr.vmem [resolvable:$true] %s54
      %60 = dma.hbm_to_vmem [thread:$0]  %s53, 256, %s55, [#allocation9], 64, 64, 4
    $region17: #{mlp_forward.1} parent=1 // pred_fallthru
      _
    // Predicated region
    $region18: #{mlp_forward.1} parent=1 // pred_check
      _
    $region19: #{mlp_forward.1} parent=1 // pred_check_branch
      %62 = sbr.rel (0) target = $region21
    $region20: #{mlp_forward.1} parent=1 // pred_region
      %64 = dma.done [#allocation3], 128
    $region21: #{mlp_forward.1} parent=1 // pred_fallthru
      _
    // Predicated region
    $region22: #{mlp_forward.1} parent=1 // pred_check
      _
    $region23: #{mlp_forward.1} parent=1 // pred_check_branch
      %66 = sbr.rel (0) target = $region25
    $region24: #{mlp_forward.1} parent=1 // pred_region
      %68 = dma.done [#allocation6], 128
    $region25: #{mlp_forward.1} parent=1 // pred_fallthru
      _
    // Predicated region
    $region26: #{mlp_forward.1} parent=1 // pred_check
      _
    $region27: #{mlp_forward.1} parent=1 // pred_check_branch
      %70 = sbr.rel (0) target = $region29
    $region28: #{mlp_forward.1} parent=1 // pred_region
      %72 = dma.done [#allocation6], 64
    $region29: #{mlp_forward.1} parent=1 // pred_fallthru
      _
    // Predicated region
    $region30: #{mlp_forward.1} parent=1 // pred_check
      _
    $region31: #{mlp_forward.1} parent=1 // pred_check_branch
      %74 = sbr.rel (0) target = $region33
    $region32: #{mlp_forward.1} parent=1 // pred_region
      %76 = dma.done [#allocation9], 256
    $region33: #{mlp_forward.1} parent=1 // pred_fallthru
      _
    %v78 = vld [vmem:[#allocation2] sm:$0xff]
    %v79 = vpack.c.bf16 %v78, %v78
    %v80 = vld [vmem:[#allocation5] sm:$0xf]
    %v81 = vld [vmem:[#allocation5 + $0x4] sm:$0xf]
    %v84 = vunpack.c.l.b16 %v80
    %v85 = vunpack.c.l.b16 %v81
    %v86 = vpack.c.b16 %v85, %v84
    %vm88 = vcmask 130048
    %v90 = vsel %vm88, %v79, 0
    %92 = vmatpush.bf16.msra.mxu0 0
    %93 = vmatpush.bf16.msra.mxu0 0
    %94 = vmatpush.bf16.msra.mxu0 0
    %95 = vmatpush.bf16.msra.mxu0 0
    %96 = vmatpush.bf16.msra.mxu0 0
    %97 = vmatpush.bf16.msra.mxu0 0
    %98 = vmatpush.bf16.msra.mxu0 0
    %99 = vmatpush.bf16.msra.mxu0 %v86
    %100 = vmatmul.bf16.gmra.mxu0 %v90
    %v101 = vpop.f32.mrf.mxu0
    %v102 = vadd.f32 0.0, %v101
    %v103 = vpop.f32.mrf.mxu0
    %104 = vdwg.mxu0
    %vm105 = vcmask 261120
    %v106 = vsel %vm105, %v102, 0.0
    %v107 = vrot.slane %v106, 4
    %v108 = vadd.f32 %v106, %v107
    %v109 = vrot.slane %v108, 2
    %v110 = vadd.f32 %v108, %v109
    %v111 = vrot.slane %v110, 1
    %v112 = vadd.f32 %v110, %v111
    %v113 = vmul.f32 %v112, 0.125
    %v114 = vmul.f32 %v102, %v102
    %v115 = vsel %vm105, %v114, 0.0
    %v116 = vrot.slane %v115, 4
    %v117 = vadd.f32 %v115, %v116
    %v118 = vrot.slane %v117, 2
    %v119 = vadd.f32 %v117, %v118
    %v120 = vrot.slane %v119, 1
    %v121 = vadd.f32 %v119, %v120
    %v122 = vmul.f32 %v121, 0.125
    %v123 = vmul.f32 %v113, %v113
    %v124 = vsub.f32 %v122, %v123
    %v125 = vmax.f32 %v124, 0.0
    %v126 = vld [vmem:[#allocation7] sm:$0x1]
    %v127 = vld [vmem:[#allocation7 + $0x1] sm:$0x1]
    %v128 = vld [vmem:[#allocation7 + $0x2] sm:$0x1]
    %v129 = vadd.f32 %v125, 1e-05
    %v130 = vrsqrt.pop %v129
    %v131 = vmul.f32 %v130, %v129
    %v132 = vmul.f32 %v131, %v130
    %v133 = vmul.f32 0.5, %v132
    %v134 = vsub.f32 1.5, %v133
    %v135 = vmul.f32 %v130, %v134
    %vm136 = vweird.f32 %v129
    %vm137 = vweird.f32 %v130
    %vm138 = vmor %vm136, %vm137
    %v139 = vsel %vm138, %v130, %v135
    %v140 = vmul.f32 %v126, %v139
    %v141 = vmul.f32 %v113, %v140
    %v142 = vsub.f32 %v127, %v141
    %v143 = vperm.slane %v140, 0
    %v144 = vmul.f32 %v102, %v143
    %v145 = vperm.slane %v142, 0
    %v146 = vadd.f32 %v144, %v145
    %v147 = vmax.f32 %v146, 0.0
    %v148 = vld [vmem:[#allocation8] sm:$0xf]
    %v149 = vld [vmem:[#allocation8 + $0x4] sm:$0xf]
    %v150 = vld [vmem:[#allocation8 + $0x8] sm:$0xf]
    %v151 = vld [vmem:[#allocation8 + $0xc] sm:$0xf]
    %v152 = vunpack.c.l.bf16 %v148
    %v153 = vunpack.c.l.bf16 %v149
    %v154 = vunpack.c.l.bf16 %v150
    %v155 = vunpack.c.l.bf16 %v151
    %v156 = vperm.slane %v128, 0
    %v158 = vsel %vm105, %v147, 0
    %160 = vmatpush.msra.mxu0 0.0
    %161 = vmatpush.msra.mxu0 0.0
    %162 = vmatpush.msra.mxu0 0.0
    %163 = vmatpush.msra.mxu0 0.0
    %164 = vmatpush.msra.mxu0 0.0
    %165 = vmatpush.msra.mxu0 0.0
    %166 = vmatpush.msra.mxu0 0.0
    %167 = vmatpush.msra.mxu0 0.0
    %168 = vmatpush.msra.mxu0 0.0
    %169 = vmatpush.msra.mxu0 0.0
    %170 = vmatpush.msra.mxu0 0.0
    %171 = vmatpush.msra.mxu0 0.0
    %172 = vmatpush.msra.mxu0 %v155
    %173 = vmatpush.msra.mxu0 %v154
    %174 = vmatpush.msra.mxu0 %v153
    %175 = vmatpush.msra.mxu0 %v152
    %176 = vmatmul.f32.gmra.mxu0 %v158
    %v177 = vpop.f32.mrf.mxu0
    %v178 = vadd.f32 %v156, %v177
    %179 = vdwg.mxu0
    %180 = vst [vmem:[#allocation10] sm:$0xff] %v178
    // Predicated region
    $region34: #{mlp_forward.1} parent=1 // pred_check
      _
    $region35: #{mlp_forward.1} parent=1 // pred_check_branch
      %182 = sbr.rel (0) target = $region37
    $region36: #{mlp_forward.1} parent=1 // pred_region
      %184 = vsyncadd [#allocation4], 0
      %s186 = sshll.u32 [#allocation10], 4
      %s187 = int_to_ptr.vmem [resolvable:$true] %s186
      %s188 = sshll.u32 %s4, 4
      %s189 = int_to_ptr.hbm [resolvable:$true] %s188
      %191 = dma.vmem_to_hbm [thread:$0]  %s187, 128, %s189, [#allocation4]
    $region37: #{mlp_forward.1} parent=1 // pred_fallthru
      _
    // Predicated region
    $region38: #{mlp_forward.1} parent=1 // pred_check
      _
    $region39: #{mlp_forward.1} parent=1 // pred_check_branch
      %193 = sbr.rel (0) target = $region41
    $region40: #{mlp_forward.1} parent=1 // pred_region
      %195 = dma.done [#allocation4], 128
    $region41: #{mlp_forward.1} parent=1 // pred_fallthru
      _
    %196 = vsyncpa [#allocation3], 1
    %197 = vsyncpa [#allocation6], 1
    %198 = vsyncpa [#allocation9], 1
    %199 = vsyncpa [#allocation4], 1

</llo_original>
